<compile_context>
chip_gen: v5e
topology: v5e:2x2
jax: 0.10.0
libtpu: 0.0.40
codegen_flags: <defaults>
</compile_context>

<pallas_src>
import numpy as np
import jax
import jax.numpy as jnp
from jax.experimental import pallas as pl
from jax.experimental.pallas import tpu as pltpu


def _upsample_conv3x3_kernel(x_ref, g_ref, a_ref, b_ref, o_ref):
    """One grid step: NB source images -> NB upsampled + 3x3-convolved images.

    x_ref: (NB, H, W*C)           source images, channels folded into lanes
    g_ref: (W*C, 3*W_new*Co)      fused [W-upsample + pad + conv-along-W], concat over kh
    a_ref: (3, NB, H_new, H)      fused [H-upsample + pad] row selection (shared A, pre-tiled over NB)
    b_ref: (1, W_new*Co)          bias tiled over W_new (lane layout of the output)
    o_ref: (NB, H_new, W_new*Co)  lane-dense output block
    """
    nb, h, wc = x_ref.shape
    _, h_new, wco = o_ref.shape

    # Free merge: H is a multiple of 8, so each image occupies whole sublane tiles.
    xf = x_ref[...].reshape(nb * h, wc)

    # Bias-initialised accumulator: a single broadcast, no separate bias-add pass.
    acc = jnp.broadcast_to(
        b_ref[...].astype(jnp.float32).reshape(1, 1, wco), (nb, h_new, wco))

    for kh in range(3):                                   # static unroll: 3 tap rows
        # W pass for tap row kh (lane-aligned G slice; wco is a multiple of 128).
        z = jnp.dot(xf, g_ref[:, kh * wco:(kh + 1) * wco],
                    preferred_element_type=jnp.float32)
        z = z.reshape(nb, h, wco)                          # free split (h multiple of 8)
        # H pass: per-image row selection; NB is a true batch dim -> no NB^2 work,
        # and z stays in f32 all the way through the accumulation.
        acc = acc + jax.lax.dot_general(
            a_ref[kh], z,
            dimension_numbers=(((2,), (1,)), ((0,), (0,))),
            preferred_element_type=jnp.float32)

    o_ref[...] = acc.astype(o_ref.dtype)


def _choose_images_per_block(bt, h, bytes_per_img, resident_bytes,
                             vmem_budget_bytes=40 << 20, min_steps=4,
                             row_target=256):
    """Images per grid step.

    (a) hard: resident weights + per-image (double-buffered) blocks fit the budget,
    (b) prefer >= min_steps grid steps (>=2 per TensorCore on v7x), falling back
        to >=2 then >=1,
    (c) among those, prefer NB*H reaching the MXU row tile (row_target), else the
        largest NB (fewer grid steps -> less per-step overhead).
    """
    divisors = [d for d in range(1, bt + 1) if bt % d == 0]
    feasible = [d for d in divisors
                if resident_bytes + d * bytes_per_img <= vmem_budget_bytes]
    if not feasible:
        return 1
    for steps in (min_steps, 2, 1):
        cands = [d for d in feasible if bt // d >= steps]
        if cands:
            big = [d for d in cands if d * h >= row_target]
            return min(big) if big else max(cands)
    return max(feasible)


def upsample3d_layer(x, weight, bias, target_size, *, compute_dtype=jnp.float32):
    """Forward of Upsample3DLayer (layout='THWC', temporal_upsample=False).

    x:      (B, T, H, W, C)
    weight: (3, 3, C, out_dim)  Conv2d weight in HWIO
    bias:   (out_dim,)
    target_size: (T_new, H_new, W_new) with T_new == T
    """
    B, T, H, W, C = x.shape
    T_new, H_new, W_new = target_size
    assert T_new == T, "temporal_upsample=False requires target T == input T"
    assert weight.shape[:2] == (3, 3), "kernel_size=3 only"
    assert weight.shape[2] == C
    Co = weight.shape[-1]
    assert H % 8 == 0 and H_new % 8 == 0, "H/H_new must be sublane (8) aligned"
    # TODO(synk): pad/mask the H axis in the BlockSpec for non-8-aligned H/H_new.
    # TODO(synk): for production channel widths (C, Co >~ 32) switch to a tap-wise
    # (per-kw) matmul of (rows, C) @ (C, Co) after a cheap W nearest-duplication,
    # instead of the folded (W*C, W_new*Co) G used here (fine for W<=8, C,Co<=16).

    BT = B * T
    WC = W * C
    WCo = W_new * Co
    out_dtype = x.dtype
    cd_itemsize = jnp.dtype(compute_dtype).itemsize
    out_itemsize = jnp.dtype(out_dtype).itemsize

    # ---- fold [W-upsample + zero-pad + conv-along-W] into G[kh] ---------------
    # sel[kw, w_src, w_out] = 1 iff output col w_out, tap kw reads source col
    # w_src = floor((w_out+kw-1) * W / W_new); zero when the tap lands in padding.
    sel = np.zeros((3, W, W_new), np.float32)
    for kw in range(3):
        for wo in range(W_new):
            q = wo + kw - 1
            if 0 <= q < W_new:
                sel[kw, (q * W) // W_new, wo] = 1.0
    # G[kh, w*C + c, wo*Co + co] = sum_kw sel[kw, w, wo] * weight[kh, kw, c, co]
    g = jnp.einsum("kwv,hkcd->hwcvd", jnp.asarray(sel), weight.astype(jnp.float32))
    g_cat = jnp.transpose(g.reshape(3, WC, WCo), (1, 0, 2)).reshape(WC, 3 * WCo)
    g_cat = g_cat.astype(compute_dtype)

    # ---- shared [H-upsample + zero-pad] row selection A[kh] (no block-diag R) --
    A = np.zeros((3, H_new, H), np.float32)
    for kh in range(3):
        for ho in range(H_new):
            p = ho + kh - 1
            if 0 <= p < H_new:
                A[kh, ho, (p * H) // H_new] = 1.0

    bias_lane = jnp.tile(bias.astype(jnp.float32), W_new).reshape(1, WCo)

    # Channels folded into the lane axis; contiguous -> free reshape in XLA.
    x3 = x.reshape(BT, H, WC).astype(compute_dtype)

    # ---- block sizing (double-buffered x/out blocks + grid-invariant weights) --
    resident_bytes = 2 * (g_cat.size * cd_itemsize + WCo * 4)      # x2: conservative
    bytes_per_img = (2 * (H * WC * cd_itemsize + H_new * WCo * out_itemsize)
                     + 2 * 3 * H_new * H * 4)                      # A replica per image
    NB = _choose_images_per_block(BT, H, bytes_per_img, resident_bytes)
    grid = BT // NB

    # Pre-tile the shared A over the NB images of a block (tiny; avoids an
    # in-kernel broadcast_in_dim that JAX would not CSE across tap rows).
    A_b = jnp.asarray(np.broadcast_to(A[:, None], (3, NB, H_new, H)).copy(),
                      dtype=jnp.float32)

    # Real work only: W-pass matmul + per-image H-pass matmul, per tap row.
    flops = grid * 3 * (2 * (NB * H) * WC * WCo + 2 * NB * H_new * H * WCo)
    bytes_accessed = (x3.size * cd_itemsize + g_cat.size * cd_itemsize
                      + A_b.size * 4 + bias_lane.size * 4
                      + BT * H_new * WCo * out_itemsize)

    out = pl.pallas_call(
        _upsample_conv3x3_kernel,
        out_shape=jax.ShapeDtypeStruct((BT, H_new, WCo), out_dtype),
        grid_spec=pltpu.PrefetchScalarGridSpec(
            num_scalar_prefetch=0,
            grid=(grid,),
            in_specs=[
                pl.BlockSpec((NB, H, WC), lambda n: (n, 0, 0)),
                pl.BlockSpec((WC, 3 * WCo), lambda n: (0, 0)),            # grid-invariant
                pl.BlockSpec((3, NB, H_new, H), lambda n: (0, 0, 0, 0)),  # grid-invariant
                pl.BlockSpec((1, WCo), lambda n: (0, 0)),                 # grid-invariant
            ],
            out_specs=pl.BlockSpec((NB, H_new, WCo), lambda n: (n, 0, 0)),
        ),
        compiler_params=pltpu.CompilerParams(
            dimension_semantics=("parallel",),
            vmem_limit_bytes=48 << 20),
        cost_estimate=pl.CostEstimate(
            flops=int(flops), transcendentals=0, bytes_accessed=int(bytes_accessed)),
    )(x3, g_cat, A_b, bias_lane)

    return out.reshape(B, T_new, H_new, W_new, Co)


if __name__ == "__main__":
    # Small shapes consistent with the module's forward.
    B, T, H, W = 2, 4, 8, 8
    dim, out_dim = 4, 8
    target_size = (T, 16, 16)   # (T_new, H_new, W_new); spatial 2x upsample

    key = jax.random.PRNGKey(0)
    kx, kw, kb = jax.random.split(key, 3)
    x = jax.random.normal(kx, (B, T, H, W, dim), dtype=jnp.float32)
    # Deterministic synthetic parameters (Conv2d(dim, out_dim, 3, padding=1) shapes).
    weight = jax.random.normal(kw, (3, 3, dim, out_dim), dtype=jnp.float32) * 0.1
    bias = jax.random.normal(kb, (out_dim,), dtype=jnp.float32) * 0.1

    out = upsample3d_layer(x, weight, bias, target_size)
    out = jax.block_until_ready(out)

    # Reference: explicit nearest upsample (PyTorch floor formula) + XLA SAME conv.
    xf = x.reshape(B * T, H, W, dim)
    ih = (jnp.arange(target_size[1]) * H) // target_size[1]
    iw = (jnp.arange(target_size[2]) * W) // target_size[2]
    x_up = xf[:, ih][:, :, iw]
    ref = jax.lax.conv_general_dilated(
        x_up, weight, window_strides=(1, 1), padding="SAME",
        dimension_numbers=("NHWC", "HWIO", "NHWC")) + bias
    ref = ref.reshape(B, *target_size, out_dim)

    assert out.shape == (B, target_size[0], target_size[1], target_size[2], out_dim)
    assert jnp.allclose(out, ref, atol=1e-4, rtol=1e-4), "mismatch vs XLA conv reference"

    print("KERNEL_OK")
</pallas_src>

<mosaic_0001>
module attributes {stable_mosaic.version = 11 : i64} {
  func.func @_upsample_conv3x3_kernel(%arg0: i32, %arg1: memref<2x8x32xf32, #tpu.memory_space<vmem>>, %arg2: memref<32x384xf32, #tpu.memory_space<vmem>>, %arg3: memref<3x2x16x8xf32, #tpu.memory_space<vmem>>, %arg4: memref<1x128xf32, #tpu.memory_space<vmem>>, %arg5: memref<2x16x128xf32, #tpu.memory_space<vmem>>) attributes {dimension_semantics = [#tpu.dimension_semantics<parallel>], iteration_bounds = array<i64: 4>, scalar_prefetch = 0 : i64, scratch_operands = 0 : i64, tpu.core_type = #tpu.core_type<tc>, window_params = [{transform_indices = @transform_0, window_bounds = array<i64: 2, 8, 32>}, {pipeline_mode = #tpu.pipeline_mode<synchronous>, transform_indices = @transform_1, window_bounds = array<i64: 32, 384>}, {pipeline_mode = #tpu.pipeline_mode<synchronous>, transform_indices = @transform_2, window_bounds = array<i64: 3, 2, 16, 8>}, {pipeline_mode = #tpu.pipeline_mode<synchronous>, transform_indices = @transform_3, window_bounds = array<i64: 1, 128>}, {transform_indices = @transform_4, window_bounds = array<i64: 2, 16, 128>}]} {
    %c0 = arith.constant 0 : index
    %c0_0 = arith.constant 0 : index
    %c0_1 = arith.constant 0 : index
    %0 = vector.load %arg1[%c0, %c0_0, %c0_1] : memref<2x8x32xf32, #tpu.memory_space<vmem>>, vector<2x8x32xf32>
    %1 = vector.shape_cast %0 : vector<2x8x32xf32> to vector<16x32xf32>
    %c0_2 = arith.constant 0 : index
    %c0_3 = arith.constant 0 : index
    %2 = vector.load %arg4[%c0_2, %c0_3] : memref<1x128xf32, #tpu.memory_space<vmem>>, vector<1x128xf32>
    %3 = vector.shape_cast %2 : vector<1x128xf32> to vector<1x1x128xf32>
    %4 = vector.shape_cast %3 : vector<1x1x128xf32> to vector<1x1x128xf32>
    %5 = vector.broadcast %4 : vector<1x1x128xf32> to vector<2x16x128xf32>
    %c0_4 = arith.constant 0 : index
    %c0_5 = arith.constant 0 : index
    %6 = vector.load %arg2[%c0_4, %c0_5] : memref<32x384xf32, #tpu.memory_space<vmem>>, vector<32x128xf32>
    %cst = arith.constant dense<0.000000e+00> : vector<16x128xf32>
    %7 = tpu.matmul %1, %6, %cst {dimension_numbers = #tpu.dot_dimension_numbers<[1], [0], [0], [1], [0, 0, 1, 1], [], []>} : vector<16x32xf32>, vector<32x128xf32>, vector<16x128xf32> -> vector<16x128xf32>
    %8 = vector.shape_cast %7 : vector<16x128xf32> to vector<2x8x128xf32>
    %c0_6 = arith.constant 0 : index
    %c0_7 = arith.constant 0 : index
    %c0_8 = arith.constant 0 : index
    %c0_9 = arith.constant 0 : index
    %9 = vector.load %arg3[%c0_6, %c0_7, %c0_8, %c0_9] : memref<3x2x16x8xf32, #tpu.memory_space<vmem>>, vector<1x2x16x8xf32>
    %10 = vector.shape_cast %9 : vector<1x2x16x8xf32> to vector<2x16x8xf32>
    %cst_10 = arith.constant dense<0.000000e+00> : vector<2x16x128xf32>
    %11 = tpu.matmul %10, %8, %cst_10 {dimension_numbers = #tpu.dot_dimension_numbers<[2], [1], [1], [2], [0, 0, 0, 1, 1, 2], [0], [0]>} : vector<2x16x8xf32>, vector<2x8x128xf32>, vector<2x16x128xf32> -> vector<2x16x128xf32>
    %12 = arith.addf %5, %11 : vector<2x16x128xf32>
    %c0_11 = arith.constant 0 : index
    %c128 = arith.constant 128 : index
    %13 = vector.load %arg2[%c0_11, %c128] : memref<32x384xf32, #tpu.memory_space<vmem>>, vector<32x128xf32>
    %cst_12 = arith.constant dense<0.000000e+00> : vector<16x128xf32>
    %14 = tpu.matmul %1, %13, %cst_12 {dimension_numbers = #tpu.dot_dimension_numbers<[1], [0], [0], [1], [0, 0, 1, 1], [], []>} : vector<16x32xf32>, vector<32x128xf32>, vector<16x128xf32> -> vector<16x128xf32>
    %15 = vector.shape_cast %14 : vector<16x128xf32> to vector<2x8x128xf32>
    %c1 = arith.constant 1 : index
    %c0_13 = arith.constant 0 : index
    %c0_14 = arith.constant 0 : index
    %c0_15 = arith.constant 0 : index
    %16 = vector.load %arg3[%c1, %c0_13, %c0_14, %c0_15] : memref<3x2x16x8xf32, #tpu.memory_space<vmem>>, vector<1x2x16x8xf32>
    %17 = vector.shape_cast %16 : vector<1x2x16x8xf32> to vector<2x16x8xf32>
    %cst_16 = arith.constant dense<0.000000e+00> : vector<2x16x128xf32>
    %18 = tpu.matmul %17, %15, %cst_16 {dimension_numbers = #tpu.dot_dimension_numbers<[2], [1], [1], [2], [0, 0, 0, 1, 1, 2], [0], [0]>} : vector<2x16x8xf32>, vector<2x8x128xf32>, vector<2x16x128xf32> -> vector<2x16x128xf32>
    %19 = arith.addf %12, %18 : vector<2x16x128xf32>
    %c0_17 = arith.constant 0 : index
    %c256 = arith.constant 256 : index
    %20 = vector.load %arg2[%c0_17, %c256] : memref<32x384xf32, #tpu.memory_space<vmem>>, vector<32x128xf32>
    %cst_18 = arith.constant dense<0.000000e+00> : vector<16x128xf32>
    %21 = tpu.matmul %1, %20, %cst_18 {dimension_numbers = #tpu.dot_dimension_numbers<[1], [0], [0], [1], [0, 0, 1, 1], [], []>} : vector<16x32xf32>, vector<32x128xf32>, vector<16x128xf32> -> vector<16x128xf32>
    %22 = vector.shape_cast %21 : vector<16x128xf32> to vector<2x8x128xf32>
    %c2 = arith.constant 2 : index
    %c0_19 = arith.constant 0 : index
    %c0_20 = arith.constant 0 : index
    %c0_21 = arith.constant 0 : index
    %23 = vector.load %arg3[%c2, %c0_19, %c0_20, %c0_21] : memref<3x2x16x8xf32, #tpu.memory_space<vmem>>, vector<1x2x16x8xf32>
    %24 = vector.shape_cast %23 : vector<1x2x16x8xf32> to vector<2x16x8xf32>
    %cst_22 = arith.constant dense<0.000000e+00> : vector<2x16x128xf32>
    %25 = tpu.matmul %24, %22, %cst_22 {dimension_numbers = #tpu.dot_dimension_numbers<[2], [1], [1], [2], [0, 0, 0, 1, 1, 2], [0], [0]>} : vector<2x16x8xf32>, vector<2x8x128xf32>, vector<2x16x128xf32> -> vector<2x16x128xf32>
    %26 = arith.addf %19, %25 : vector<2x16x128xf32>
    %c0_23 = arith.constant 0 : index
    %c0_24 = arith.constant 0 : index
    %c0_25 = arith.constant 0 : index
    %27 = vector.load %arg5[%c0_23, %c0_24, %c0_25] : memref<2x16x128xf32, #tpu.memory_space<vmem>>, vector<2x16x128xf32>
    tpu.vector_store %arg5[%c0_23, %c0_24, %c0_25], %26 {strides = array<i32>} : memref<2x16x128xf32, #tpu.memory_space<vmem>>, vector<2x16x128xf32>,
    return
  }
  func.func @transform_0(%arg0: i32) -> (i32, i32, i32) {
    %c0_i32 = arith.constant 0 : i32
    %c0_i32_0 = arith.constant 0 : i32
    %c0_i32_1 = arith.constant 0 : i32
    return %arg0, %c0_i32, %c0_i32_0 : i32, i32, i32
  }
  func.func @transform_1(%arg0: i32) -> (i32, i32) {
    %c0_i32 = arith.constant 0 : i32
    %c0_i32_0 = arith.constant 0 : i32
    %c0_i32_1 = arith.constant 0 : i32
    return %c0_i32, %c0_i32_0 : i32, i32
  }
  func.func @transform_2(%arg0: i32) -> (i32, i32, i32, i32) {
    %c0_i32 = arith.constant 0 : i32
    %c0_i32_0 = arith.constant 0 : i32
    %c0_i32_1 = arith.constant 0 : i32
    %c0_i32_2 = arith.constant 0 : i32
    %c0_i32_3 = arith.constant 0 : i32
    return %c0_i32, %c0_i32_0, %c0_i32_1, %c0_i32_2 : i32, i32, i32, i32
  }
  func.func @transform_3(%arg0: i32) -> (i32, i32) {
    %c0_i32 = arith.constant 0 : i32
    %c0_i32_0 = arith.constant 0 : i32
    %c0_i32_1 = arith.constant 0 : i32
    return %c0_i32, %c0_i32_0 : i32, i32
  }
  func.func @transform_4(%arg0: i32) -> (i32, i32, i32) {
    %c0_i32 = arith.constant 0 : i32
    %c0_i32_0 = arith.constant 0 : i32
    %c0_i32_1 = arith.constant 0 : i32
    return %arg0, %c0_i32, %c0_i32_0 : i32, i32, i32
  }
}

</mosaic_0001>

<llo_original>
// kernel: tpu_custom_call.1
$region0: #{tpu_custom_call.1}
  #allocation0 [shape = 'u32[]', space=smem, size = 0x4, offset = 0x4, fixed_abs, tag = 'smem constant byte address 0x4 - core index']
  #allocation1 [shape = 'u32[72,128]{1,0:T(1,128)}', space=vmem, size = 0x9000, scoped, tag = 'internal scratch']
  %s0 = inlined_call_operand.hbm [shape: f32[8,8,32], index: 0, kind: input, shape index: {}]
  %s1 = inlined_call_operand.vmem [shape: f32[32,384], index: 1, kind: input, shape index: {}]
  %s2 = inlined_call_operand.vmem [shape: f32[3,2,16,8], index: 2, kind: input, shape index: {}]
  %s3 = inlined_call_operand.vmem [shape: f32[1,128], index: 3, kind: input, shape index: {}]
  %s4 = inlined_call_operand.hbm [shape: f32[8,16,128], index: 4, kind: output, shape index: {}]
  %s5 = sld [smem:[#allocation0]]
  $region53: #{tpu_custom_call.1} parent=0
    _
  %s7 = ssub.s32 1, %s5
  %s8 = scalar_select 0, %s7, %s5
  $region1: #{tpu_custom_call.1} parent=0
    #allocation2 [shape = 'u8[16384]{0}', space=vmem, size = 0x4000, scoped, tag = 'input window, operand 0']
    #allocation3 [shape = 's32[2]{0}', space=sflag, size = 0x8, scoped, tag = 'scoped memory for tpu_custom_call.1']
    #allocation4 [shape = 's32[2]{0}', space=sflag, size = 0x8, scoped, tag = 'scoped memory for tpu_custom_call.1']
    #allocation5 [shape = 'u8[32768]{0}', space=vmem, size = 0x8000, scoped, tag = 'output window, operand 0']
    %9 = vsyncpa [#allocation3], 0
    %s10 = scalar_lea.sflag [#allocation3], 1
    %11 = vsyncpa %s10, 0
    %12 = vsyncpa [#allocation4], 0
    %s13 = scalar_lea.sflag [#allocation4], 1
    %14 = vsyncpa %s13, 0
    loop: start=0, step=1, limit=6
    $region2: #{tpu_custom_call.1} parent=1 // loop_pre_header
      _
    $region3: #{tpu_custom_call.1} parent=1 // loop_header
      %s16 = sphi 0, %s20
      %p17 = scmp.ge.s32.totalorder %s16, 6
      %s26 = sphi 0, %s28
      %s29 = sphi 0, %s26
      %s30 = sphi 0, %s29
      %s46 = sphi 0, %s30
      %s50 = sphi 0, %s50
      %s52 = sphi 0, %s50
      %s53 = sphi 0, %s52
      %s67 = sphi 0, %s53
      %s71 = sphi 0, %s71
      %s73 = sphi 0, %s71
      %s74 = sphi 0, %s73
      %s88 = sphi 0, %s74
      %s92 = sphi 0, %s92
      %s94 = sphi 0, %s92
      %s95 = sphi 0, %s94
      %s109 = sphi 0, %s95
      %s115 = sphi 0, %s117
      %s118 = sphi 0, %s115
      %s119 = sphi 0, %s118
      %s135 = sphi 0, %s119
    $region4: #{tpu_custom_call.1} parent=1 // loop_header_branch
      %19 = sbr.rel (%p17) target = $region8
    $region5: #{tpu_custom_call.1} parent=1 // loop_body
      %s21 = ssub.s32 %s16, 1
      %s22 = ssub.s32 %s16, 2
      %s23 = sadd.s32 %s16, 1
      %s24 = ssub.s32 %s16, %s23
      %p25 = scmp.eq.s32.totalorder %s24, 0
      %s27 = sadd.s32 %s26, 1
      %s28 = scalar_select %p25, %s26, %s27
      %p31 = pneg %p25
      %p32 = scmp.eq.s32.totalorder %s16, 3
      %p33 = por %p31, %p32
      %p34 = scmp.ne.s32.totalorder %s26, %s29
      %p35 = scmp.eq.s32.totalorder %s16, 0
      %p36 = por %p34, %p35
      %p37 = scmp.ne.s32.totalorder %s26, %s29
      %p38 = scmp.eq.s32.totalorder %s21, 3
      %p39 = por %p37, %p38
      %p40 = scmp.ne.s32.totalorder %s29, %s30
      %p41 = scmp.eq.s32.totalorder %s21, 0
      %p42 = por %p40, %p41
      %p43 = scmp.ne.s32.totalorder %s29, %s30
      %p44 = scmp.eq.s32.totalorder %s22, 3
      %p45 = por %p43, %p44
      %p47 = scmp.ne.s32.totalorder %s30, %s46
      %p48 = scmp.eq.s32.totalorder %s22, 0
      %p49 = por %p47, %p48
      %s51 = sadd.s32 %s50, 1
      %p54 = scmp.eq.s32.totalorder %s16, 3
      %p55 = scmp.ne.s32.totalorder %s50, %s52
      %p56 = scmp.eq.s32.totalorder %s16, 0
      %p57 = por %p55, %p56
      %p58 = scmp.ne.s32.totalorder %s50, %s52
      %p59 = scmp.eq.s32.totalorder %s21, 3
      %p60 = por %p58, %p59
      %p61 = scmp.ne.s32.totalorder %s52, %s53
      %p62 = scmp.eq.s32.totalorder %s21, 0
      %p63 = por %p61, %p62
      %p64 = scmp.ne.s32.totalorder %s52, %s53
      %p65 = scmp.eq.s32.totalorder %s22, 3
      %p66 = por %p64, %p65
      %p68 = scmp.ne.s32.totalorder %s53, %s67
      %p69 = scmp.eq.s32.totalorder %s22, 0
      %p70 = por %p68, %p69
      %s72 = sadd.s32 %s71, 1
      %p75 = scmp.eq.s32.totalorder %s16, 3
      %p76 = scmp.ne.s32.totalorder %s71, %s73
      %p77 = scmp.eq.s32.totalorder %s16, 0
      %p78 = por %p76, %p77
      %p79 = scmp.ne.s32.totalorder %s71, %s73
      %p80 = scmp.eq.s32.totalorder %s21, 3
      %p81 = por %p79, %p80
      %p82 = scmp.ne.s32.totalorder %s73, %s74
      %p83 = scmp.eq.s32.totalorder %s21, 0
      %p84 = por %p82, %p83
      %p85 = scmp.ne.s32.totalorder %s73, %s74
      %p86 = scmp.eq.s32.totalorder %s22, 3
      %p87 = por %p85, %p86
      %p89 = scmp.ne.s32.totalorder %s74, %s88
      %p90 = scmp.eq.s32.totalorder %s22, 0
      %p91 = por %p89, %p90
      %s93 = sadd.s32 %s92, 1
      %p96 = scmp.eq.s32.totalorder %s16, 3
      %p97 = scmp.ne.s32.totalorder %s92, %s94
      %p98 = scmp.eq.s32.totalorder %s16, 0
      %p99 = por %p97, %p98
      %p100 = scmp.ne.s32.totalorder %s92, %s94
      %p101 = scmp.eq.s32.totalorder %s21, 3
      %p102 = por %p100, %p101
      %p103 = scmp.ne.s32.totalorder %s94, %s95
      %p104 = scmp.eq.s32.totalorder %s21, 0
      %p105 = por %p103, %p104
      %p106 = scmp.ne.s32.totalorder %s94, %s95
      %p107 = scmp.eq.s32.totalorder %s22, 3
      %p108 = por %p106, %p107
      %p110 = scmp.ne.s32.totalorder %s95, %s109
      %p111 = scmp.eq.s32.totalorder %s22, 0
      %p112 = por %p110, %p111
      %s113 = ssub.s32 %s16, %s23
      %p114 = scmp.eq.s32.totalorder %s113, 0
      %s116 = sadd.s32 %s115, 1
      %s117 = scalar_select %p114, %s115, %s116
      %p120 = pneg %p114
      %p121 = scmp.eq.s32.totalorder %s16, 3
      %p122 = por %p120, %p121
      %p123 = scmp.ne.s32.totalorder %s115, %s118
      %p124 = scmp.eq.s32.totalorder %s16, 0
      %p125 = por %p123, %p124
      %p126 = scmp.ne.s32.totalorder %s115, %s118
      %p127 = scmp.eq.s32.totalorder %s21, 3
      %p128 = por %p126, %p127
      %p129 = scmp.ne.s32.totalorder %s118, %s119
      %p130 = scmp.eq.s32.totalorder %s21, 0
      %p131 = por %p129, %p130
      %p132 = scmp.ne.s32.totalorder %s118, %s119
      %p133 = scmp.eq.s32.totalorder %s22, 3
      %p134 = por %p132, %p133
      %p136 = scmp.ne.s32.totalorder %s119, %s135
      %p137 = scmp.eq.s32.totalorder %s22, 0
      %p138 = por %p136, %p137
      %p139 = scmp.le.s32.totalorder 1, %s16
      %p140 = scmp.lt.s32.totalorder %s16, 5
      %p141 = pnand %p139, %p140
      %p142 = pneg %p141
      // Predicated region
      $region9: #{tpu_custom_call.1} parent=5 // pred_check
        _
      $region10: #{tpu_custom_call.1} parent=5 // pred_check_branch
        %144 = sbr.rel (%p141) target = $region12
      $region11: #{tpu_custom_call.1} parent=5 // pred_region
        %s145 = ssub.s32 %s16, 1
        // Predicated region
        $region13: #{tpu_custom_call.1} parent=11 // pred_check
          %p146 = pneg %p63
        $region14: #{tpu_custom_call.1} parent=11 // pred_check_branch
          %148 = sbr.rel (%p146) target = $region16
        $region15: #{tpu_custom_call.1} parent=11 // pred_region
          _
        $region16: #{tpu_custom_call.1} parent=11 // pred_fallthru
          _
        // Predicated region
        $region17: #{tpu_custom_call.1} parent=11 // pred_check
          %p149 = pneg %p84
        $region18: #{tpu_custom_call.1} parent=11 // pred_check_branch
          %151 = sbr.rel (%p149) target = $region20
        $region19: #{tpu_custom_call.1} parent=11 // pred_region
          _
        $region20: #{tpu_custom_call.1} parent=11 // pred_fallthru
          _
        // Predicated region
        $region21: #{tpu_custom_call.1} parent=11 // pred_check
          %p152 = pneg %p105
        $region22: #{tpu_custom_call.1} parent=11 // pred_check_branch
          %154 = sbr.rel (%p152) target = $region24
        $region23: #{tpu_custom_call.1} parent=11 // pred_region
          _
        $region24: #{tpu_custom_call.1} parent=11 // pred_fallthru
          _
      $region12: #{tpu_custom_call.1} parent=5 // pred_fallthru
        _
      %p155 = scmp.lt.s32.totalorder %s16, 4
      // Predicated region
      $region25: #{tpu_custom_call.1} parent=5 // pred_check
        %p156 = pneg %p155
      $region26: #{tpu_custom_call.1} parent=5 // pred_check_branch
        %158 = sbr.rel (%p156) target = $region28
      $region27: #{tpu_custom_call.1} parent=5 // pred_region
        // Predicated region
        $region29: #{tpu_custom_call.1} parent=27 // pred_check
          %p159 = pneg %p36
        $region30: #{tpu_custom_call.1} parent=27 // pred_check_branch
          %161 = sbr.rel (%p159) target = $region32
        $region31: #{tpu_custom_call.1} parent=27 // pred_region
          %s162 = sand.u32 %s26, 1
          %s163 = scalar_lea.sflag [#allocation3], %s162
          %s164 = sand.u32 %s26, 1
          %s165 = smul.addr %s164, 16
          %s166 = scalar_lea.vmem [#allocation2], %s165
          %s167 = smul.u32 2, %s16
          %169 = vsyncadd %s163, 0
          %s170 = smul.addr %s167, 8
          %s171 = scalar_lea.hbm %s0, %s170
          %s172 = sshll.u32 %s171, 4
          %s173 = int_to_ptr.hbm [resolvable:$true] %s172
          %s174 = sshll.u32 %s166, 4
          %s175 = int_to_ptr.vmem [resolvable:$true] %s174
          %180 = dma.hbm_to_vmem [thread:$0]  %s173, 256, %s175, %s163, 128, 128, 8
        $region32: #{tpu_custom_call.1} parent=27 // pred_fallthru
          _
      $region28: #{tpu_custom_call.1} parent=5 // pred_fallthru
        _
      %p181 = scmp.le.s32.totalorder 1, %s16
      %p182 = scmp.lt.s32.totalorder %s16, 5
      %p183 = pnand %p181, %p182
      %p184 = pneg %p183
      // Predicated region
      $region33: #{tpu_custom_call.1} parent=5 // pred_check
        _
      $region34: #{tpu_custom_call.1} parent=5 // pred_check_branch
        %186 = sbr.rel (%p183) target = $region36
      $region35: #{tpu_custom_call.1} parent=5 // pred_region
        %s187 = ssub.s32 %s16, 1
        %s188 = sand.u32 %s29, 1
        %s189 = scalar_lea.sflag [#allocation3], %s188
        %s190 = sand.u32 %s29, 1
        %s191 = smul.addr %s190, 16
        %s192 = scalar_lea.vmem [#allocation2], %s191
        // Predicated region
        $region37: #{tpu_custom_call.1} parent=35 // pred_check
          %p193 = pneg %p42
        $region38: #{tpu_custom_call.1} parent=35 // pred_check_branch
          %195 = sbr.rel (%p193) target = $region40
        $region39: #{tpu_custom_call.1} parent=35 // pred_region
          %197 = dma.done %s189, 256
        $region40: #{tpu_custom_call.1} parent=35 // pred_fallthru
          _
        %s198 = sand.u32 %s29, 1
        %s199 = scalar_lea.sflag [#allocation3], %s198
        %s200 = sand.u32 %s29, 1
        %s201 = smul.addr %s200, 16
        %s202 = scalar_lea.vmem [#allocation2], %s201
        %p203 = pneg %p42
        %p204 = pneg %p39
        %p205 = pneg %p63
        %p206 = pneg %p60
        %p207 = pneg %p84
        %p208 = pneg %p81
        %p209 = pneg %p105
        %p210 = pneg %p102
        %p211 = pneg %p131
        %p212 = pneg %p128
        %s213 = sand.u32 %s118, 1
        %s214 = scalar_lea.sflag [#allocation4], %s213
        %s215 = sand.u32 %s118, 1
        %s216 = smul.addr %s215, 32
        %s217 = scalar_lea.vmem [#allocation5], %s216
        %s218 = smul.u32 2, %s21
        %s219 = smul.u32 2, %s21
        %v220 = vld [vmem:[%s192] sm:$0xff]
        %v221 = vld [vmem:[%s192 + $0x8] sm:$0xff]
        %v222 = vld [vmem:[%s3] sm:$0x1]
        %v224 = vperm.slane %v222, 0
        %v226 = vld [vmem:[%s1] sm:$0xff]
        %v227 = vld [vmem:[%s1 + $0x18] sm:$0xff]
        %v228 = vld [vmem:[%s1 + $0x30] sm:$0xff]
        %v229 = vld [vmem:[%s1 + $0x48] sm:$0xff]
        %vm230 = vcmask 261120
        %v232 = vsel %vm230, %v220, 0
        %v235 = vsel %vm230, %v221, 0
        %237 = vmatpush.msra.mxu0 0.0
        %238 = vmatpush.msra.mxu0 0.0
        %239 = vmatpush.msra.mxu0 0.0
        %240 = vmatpush.msra.mxu0 0.0
        %241 = vmatpush.msra.mxu0 0.0
        %242 = vmatpush.msra.mxu0 0.0
        %243 = vmatpush.msra.mxu0 0.0
        %244 = vmatpush.msra.mxu0 0.0
        %245 = vmatpush.msra.mxu0 0.0
        %246 = vmatpush.msra.mxu0 0.0
        %247 = vmatpush.msra.mxu0 0.0
        %248 = vmatpush.msra.mxu0 0.0
        %249 = vmatpush.msra.mxu0 %v229
        %250 = vmatpush.msra.mxu0 %v228
        %251 = vmatpush.msra.mxu0 %v227
        %252 = vmatpush.msra.mxu0 %v226
        %253 = vmatmul.f32.gmra.mxu0 %v232
        %v254 = vpop.f32.mrf.mxu0
        %v255 = vadd.f32 0.0, %v254
        %256 = vmatmul.f32.gmra.mxu0 %v235
        %v257 = vpop.f32.mrf.mxu0
        %v258 = vadd.f32 0.0, %v257
        %259 = vdwg.mxu0
        %v260 = vld [vmem:[%s2] sm:$0xff]
        %v261 = vld [vmem:[%s2 + $0x8] sm:$0xff]
        %v262 = vld [vmem:[%s2 + $0x10] sm:$0xff]
        %v263 = vld [vmem:[%s2 + $0x18] sm:$0xff]
        %vm264 = vcmask 64512
        %v266 = vsel %vm264, %v260, 0
        %v269 = vsel %vm264, %v261, 0
        %271 = vmatpush.msra.mxu0 0.0
        %272 = vmatpush.msra.mxu0 0.0
        %273 = vmatpush.msra.mxu0 0.0
        %274 = vmatpush.msra.mxu0 0.0
        %275 = vmatpush.msra.mxu0 0.0
        %276 = vmatpush.msra.mxu0 0.0
        %277 = vmatpush.msra.mxu0 0.0
        %278 = vmatpush.msra.mxu0 0.0
        %279 = vmatpush.msra.mxu0 0.0
        %280 = vmatpush.msra.mxu0 0.0
        %281 = vmatpush.msra.mxu0 0.0
        %282 = vmatpush.msra.mxu0 0.0
        %283 = vmatpush.msra.mxu0 0.0
        %284 = vmatpush.msra.mxu0 0.0
        %285 = vmatpush.msra.mxu0 0.0
        %286 = vmatpush.msra.mxu0 %v255
        %287 = vmatmul.f32.gmra.mxu0 %v266
        %v288 = vpop.f32.mrf.mxu0
        %v289 = vadd.f32 0.0, %v288
        %290 = vmatmul.f32.gmra.mxu0 %v269
        %v291 = vpop.f32.mrf.mxu0
        %v292 = vadd.f32 0.0, %v291
        %293 = vdwg.mxu0
        %v295 = vsel %vm264, %v262, 0
        %v298 = vsel %vm264, %v263, 0
        %300 = vmatpush.msra.mxu0 0.0
        %301 = vmatpush.msra.mxu0 0.0
        %302 = vmatpush.msra.mxu0 0.0
        %303 = vmatpush.msra.mxu0 0.0
        %304 = vmatpush.msra.mxu0 0.0
        %305 = vmatpush.msra.mxu0 0.0
        %306 = vmatpush.msra.mxu0 0.0
        %307 = vmatpush.msra.mxu0 0.0
        %308 = vmatpush.msra.mxu0 0.0
        %309 = vmatpush.msra.mxu0 0.0
        %310 = vmatpush.msra.mxu0 0.0
        %311 = vmatpush.msra.mxu0 0.0
        %312 = vmatpush.msra.mxu0 0.0
        %313 = vmatpush.msra.mxu0 0.0
        %314 = vmatpush.msra.mxu0 0.0
        %315 = vmatpush.msra.mxu0 %v258
        %316 = vmatmul.f32.gmra.mxu0 %v295
        %v317 = vpop.f32.mrf.mxu0
        %v318 = vadd.f32 0.0, %v317
        %319 = vmatmul.f32.gmra.mxu0 %v298
        %v320 = vpop.f32.mrf.mxu0
        %v321 = vadd.f32 0.0, %v320
        %322 = vdwg.mxu0
        %v323 = vadd.f32 %v224, %v289
        %v324 = vadd.f32 %v224, %v292
        %v325 = vadd.f32 %v224, %v318
        %v326 = vadd.f32 %v224, %v321
        %v327 = vld [vmem:[%s1 + $0x8] sm:$0xff]
        %v328 = vld [vmem:[%s1 + $0x20] sm:$0xff]
        %v329 = vld [vmem:[%s1 + $0x38] sm:$0xff]
        %v330 = vld [vmem:[%s1 + $0x50] sm:$0xff]
        %331 = vmatpush.msra.mxu0 0.0
        %332 = vmatpush.msra.mxu0 0.0
        %333 = vmatpush.msra.mxu0 0.0
        %334 = vmatpush.msra.mxu0 0.0
        %335 = vmatpush.msra.mxu0 0.0
        %336 = vmatpush.msra.mxu0 0.0
        %337 = vmatpush.msra.mxu0 0.0
        %338 = vmatpush.msra.mxu0 0.0
        %339 = vmatpush.msra.mxu0 0.0
        %340 = vmatpush.msra.mxu0 0.0
        %341 = vmatpush.msra.mxu0 0.0
        %342 = vmatpush.msra.mxu0 0.0
        %343 = vmatpush.msra.mxu0 %v330
        %344 = vmatpush.msra.mxu0 %v329
        %345 = vmatpush.msra.mxu0 %v328
        %346 = vmatpush.msra.mxu0 %v327
        %347 = vmatmul.f32.gmra.mxu0 %v232
        %v348 = vpop.f32.mrf.mxu0
        %v349 = vadd.f32 0.0, %v348
        %350 = vmatmul.f32.gmra.mxu0 %v235
        %v351 = vpop.f32.mrf.mxu0
        %v352 = vadd.f32 0.0, %v351
        %353 = vdwg.mxu0
        %s354 = scalar_lea.vmem %s2, 32
        %v355 = vld [vmem:[%s354] sm:$0xff]
        %v356 = vld [vmem:[%s354 + $0x8] sm:$0xff]
        %v357 = vld [vmem:[%s354 + $0x10] sm:$0xff]
        %v358 = vld [vmem:[%s354 + $0x18] sm:$0xff]
        %v360 = vsel %vm264, %v355, 0
        %v363 = vsel %vm264, %v356, 0
        %365 = vmatpush.msra.mxu0 0.0
        %366 = vmatpush.msra.mxu0 0.0
        %367 = vmatpush.msra.mxu0 0.0
        %368 = vmatpush.msra.mxu0 0.0
        %369 = vmatpush.msra.mxu0 0.0
        %370 = vmatpush.msra.mxu0 0.0
        %371 = vmatpush.msra.mxu0 0.0
        %372 = vmatpush.msra.mxu0 0.0
        %373 = vmatpush.msra.mxu0 0.0
        %374 = vmatpush.msra.mxu0 0.0
        %375 = vmatpush.msra.mxu0 0.0
        %376 = vmatpush.msra.mxu0 0.0
        %377 = vmatpush.msra.mxu0 0.0
        %378 = vmatpush.msra.mxu0 0.0
        %379 = vmatpush.msra.mxu0 0.0
        %380 = vmatpush.msra.mxu0 %v349
        %381 = vmatmul.f32.gmra.mxu0 %v360
        %v382 = vpop.f32.mrf.mxu0
        %v383 = vadd.f32 0.0, %v382
        %384 = vmatmul.f32.gmra.mxu0 %v363
        %v385 = vpop.f32.mrf.mxu0
        %v386 = vadd.f32 0.0, %v385
        %387 = vdwg.mxu0
        %v389 = vsel %vm264, %v357, 0
        %v392 = vsel %vm264, %v358, 0
        %394 = vmatpush.msra.mxu0 0.0
        %395 = vmatpush.msra.mxu0 0.0
        %396 = vmatpush.msra.mxu0 0.0
        %397 = vmatpush.msra.mxu0 0.0
        %398 = vmatpush.msra.mxu0 0.0
        %399 = vmatpush.msra.mxu0 0.0
        %400 = vmatpush.msra.mxu0 0.0
        %401 = vmatpush.msra.mxu0 0.0
        %402 = vmatpush.msra.mxu0 0.0
        %403 = vmatpush.msra.mxu0 0.0
        %404 = vmatpush.msra.mxu0 0.0
        %405 = vmatpush.msra.mxu0 0.0
        %406 = vmatpush.msra.mxu0 0.0
        %407 = vmatpush.msra.mxu0 0.0
        %408 = vmatpush.msra.mxu0 0.0
        %409 = vmatpush.msra.mxu0 %v352
        %410 = vmatmul.f32.gmra.mxu0 %v389
        %v411 = vpop.f32.mrf.mxu0
        %v412 = vadd.f32 0.0, %v411
        %413 = vmatmul.f32.gmra.mxu0 %v392
        %v414 = vpop.f32.mrf.mxu0
        %v415 = vadd.f32 0.0, %v414
        %416 = vdwg.mxu0
        %v417 = vadd.f32 %v323, %v383
        %v418 = vadd.f32 %v324, %v386
        %v419 = vadd.f32 %v325, %v412
        %v420 = vadd.f32 %v326, %v415
        %v421 = vld [vmem:[%s1 + $0x10] sm:$0xff]
        %v422 = vld [vmem:[%s1 + $0x28] sm:$0xff]
        %v423 = vld [vmem:[%s1 + $0x40] sm:$0xff]
        %v424 = vld [vmem:[%s1 + $0x58] sm:$0xff]
        %425 = vmatpush.msra.mxu0 0.0
        %426 = vmatpush.msra.mxu0 0.0
        %427 = vmatpush.msra.mxu0 0.0
        %428 = vmatpush.msra.mxu0 0.0
        %429 = vmatpush.msra.mxu0 0.0
        %430 = vmatpush.msra.mxu0 0.0
        %431 = vmatpush.msra.mxu0 0.0
        %432 = vmatpush.msra.mxu0 0.0
        %433 = vmatpush.msra.mxu0 0.0
        %434 = vmatpush.msra.mxu0 0.0
        %435 = vmatpush.msra.mxu0 0.0
        %436 = vmatpush.msra.mxu0 0.0
        %437 = vmatpush.msra.mxu0 %v424
        %438 = vmatpush.msra.mxu0 %v423
        %439 = vmatpush.msra.mxu0 %v422
        %440 = vmatpush.msra.mxu0 %v421
        %441 = vmatmul.f32.gmra.mxu0 %v232
        %v442 = vpop.f32.mrf.mxu0
        %v443 = vadd.f32 0.0, %v442
        %444 = vmatmul.f32.gmra.mxu0 %v235
        %v445 = vpop.f32.mrf.mxu0
        %v446 = vadd.f32 0.0, %v445
        %447 = vdwg.mxu0
        %s448 = scalar_lea.vmem %s2, 64
        %v449 = vld [vmem:[%s448] sm:$0xff]
        %v450 = vld [vmem:[%s448 + $0x8] sm:$0xff]
        %v451 = vld [vmem:[%s448 + $0x10] sm:$0xff]
        %v452 = vld [vmem:[%s448 + $0x18] sm:$0xff]
        %v454 = vsel %vm264, %v449, 0
        %v457 = vsel %vm264, %v450, 0
        %459 = vmatpush.msra.mxu0 0.0
        %460 = vmatpush.msra.mxu0 0.0
        %461 = vmatpush.msra.mxu0 0.0
        %462 = vmatpush.msra.mxu0 0.0
        %463 = vmatpush.msra.mxu0 0.0
        %464 = vmatpush.msra.mxu0 0.0
        %465 = vmatpush.msra.mxu0 0.0
        %466 = vmatpush.msra.mxu0 0.0
        %467 = vmatpush.msra.mxu0 0.0
        %468 = vmatpush.msra.mxu0 0.0
        %469 = vmatpush.msra.mxu0 0.0
        %470 = vmatpush.msra.mxu0 0.0
        %471 = vmatpush.msra.mxu0 0.0
        %472 = vmatpush.msra.mxu0 0.0
        %473 = vmatpush.msra.mxu0 0.0
        %474 = vmatpush.msra.mxu0 %v443
        %475 = vmatmul.f32.gmra.mxu0 %v454
        %v476 = vpop.f32.mrf.mxu0
        %v477 = vadd.f32 0.0, %v476
        %478 = vmatmul.f32.gmra.mxu0 %v457
        %v479 = vpop.f32.mrf.mxu0
        %v480 = vadd.f32 0.0, %v479
        %481 = vdwg.mxu0
        %v483 = vsel %vm264, %v451, 0
        %v486 = vsel %vm264, %v452, 0
        %488 = vmatpush.msra.mxu0 0.0
        %489 = vmatpush.msra.mxu0 0.0
        %490 = vmatpush.msra.mxu0 0.0
        %491 = vmatpush.msra.mxu0 0.0
        %492 = vmatpush.msra.mxu0 0.0
        %493 = vmatpush.msra.mxu0 0.0
        %494 = vmatpush.msra.mxu0 0.0
        %495 = vmatpush.msra.mxu0 0.0
        %496 = vmatpush.msra.mxu0 0.0
        %497 = vmatpush.msra.mxu0 0.0
        %498 = vmatpush.msra.mxu0 0.0
        %499 = vmatpush.msra.mxu0 0.0
        %500 = vmatpush.msra.mxu0 0.0
        %501 = vmatpush.msra.mxu0 0.0
        %502 = vmatpush.msra.mxu0 0.0
        %503 = vmatpush.msra.mxu0 %v446
        %504 = vmatmul.f32.gmra.mxu0 %v483
        %v505 = vpop.f32.mrf.mxu0
        %v506 = vadd.f32 0.0, %v505
        %507 = vmatmul.f32.gmra.mxu0 %v486
        %v508 = vpop.f32.mrf.mxu0
        %v509 = vadd.f32 0.0, %v508
        %510 = vdwg.mxu0
        %v511 = vadd.f32 %v417, %v477
        %v512 = vadd.f32 %v418, %v480
        %v513 = vadd.f32 %v419, %v506
        %v514 = vadd.f32 %v420, %v509
        %515 = vst [vmem:[%s217] sm:$0xff] %v511
        %516 = vst [vmem:[%s217 + $0x8] sm:$0xff] %v512
        %517 = vst [vmem:[%s217 + $0x10] sm:$0xff] %v513
        %518 = vst [vmem:[%s217 + $0x18] sm:$0xff] %v514
        %s519 = sand.u32 %s118, 1
        %s520 = scalar_lea.sflag [#allocation4], %s519
        %s521 = sand.u32 %s118, 1
        %s522 = smul.addr %s521, 32
        %s523 = scalar_lea.vmem [#allocation5], %s522
        // Predicated region
        $region41: #{tpu_custom_call.1} parent=35 // pred_check
          %p524 = pneg %p128
        $region42: #{tpu_custom_call.1} parent=35 // pred_check_branch
          %526 = sbr.rel (%p524) target = $region44
        $region43: #{tpu_custom_call.1} parent=35 // pred_region
          %s527 = smul.u32 2, %s21
          %529 = vsyncadd %s520, 0
          %s530 = smul.addr %s527, 2
          %s531 = smul.addr %s530, 8
          %s532 = scalar_lea.hbm %s4, %s531
          %s533 = sshll.u32 %s523, 4
          %s534 = int_to_ptr.vmem [resolvable:$true] %s533
          %s535 = sshll.u32 %s532, 4
          %s536 = int_to_ptr.hbm [resolvable:$true] %s535
          %541 = dma.vmem_to_hbm [thread:$0]  %s534, 512, %s536, %s520, 128, 128, 8
        $region44: #{tpu_custom_call.1} parent=35 // pred_fallthru
          _
      $region36: #{tpu_custom_call.1} parent=5 // pred_fallthru
        _
      %p542 = scmp.le.s32.totalorder 2, %s16
      // Predicated region
      $region45: #{tpu_custom_call.1} parent=5 // pred_check
        %p543 = pneg %p542
      $region46: #{tpu_custom_call.1} parent=5 // pred_check_branch
        %545 = sbr.rel (%p543) target = $region48
      $region47: #{tpu_custom_call.1} parent=5 // pred_region
        %s546 = ssub.s32 %s16, 2
        // Predicated region
        $region49: #{tpu_custom_call.1} parent=47 // pred_check
          %p547 = pneg %p134
        $region50: #{tpu_custom_call.1} parent=47 // pred_check_branch
          %549 = sbr.rel (%p547) target = $region52
        $region51: #{tpu_custom_call.1} parent=47 // pred_region
          %s550 = sand.u32 %s119, 1
          %s551 = scalar_lea.sflag [#allocation4], %s550
          %s552 = sand.u32 %s119, 1
          %s553 = smul.addr %s552, 32
          %s554 = scalar_lea.vmem [#allocation5], %s553
          %556 = dma.done %s551, 512
        $region52: #{tpu_custom_call.1} parent=47 // pred_fallthru
          _
      $region48: #{tpu_custom_call.1} parent=5 // pred_fallthru
        _
    $region6: #{tpu_custom_call.1} parent=1 // loop_footer
      %s20 = sadd.s32 1, %s16
    $region7: #{tpu_custom_call.1} parent=1 // loop_footer_branch
      %15 = sbr.rel target = $region3
    $region8: #{tpu_custom_call.1} parent=1 // loop_exit
      _
    %557 = vsyncpa [#allocation3], 1
    %s558 = scalar_lea.sflag [#allocation3], 1
    %559 = vsyncpa %s558, 1
    %560 = vsyncpa [#allocation4], 1
    %s561 = scalar_lea.sflag [#allocation4], 1
    %562 = vsyncpa %s561, 1

</llo_original>
